<compile_context>
chip_gen: v5e
topology: v5e:2x2
jax: 0.10.0
libtpu: 0.0.40
codegen_flags: <defaults>
</compile_context>

<pallas_src>
import jax
import jax.numpy as jnp
from jax.experimental import pallas as pl
from jax.experimental.pallas import tpu as pltpu


def _round_up(x, m):
    return (x + m - 1) // m * m


def _siamese_mlp_kernel(x_ref, w1_ref, b1_ref, w2_ref, b2_ref, o_ref, acc_ref):
    # Grid: (row_blocks, k_blocks)   row axis "parallel", K axis "arbitrary".
    # x_ref:  (TR, TK)          one row-tile x K-tile of the folded input
    # w1_ref: (TK, HID_pad)     K-slice of the first weight matrix
    # b1_ref: (1, HID_pad), w2_ref: (HID_pad, E_pad), b2_ref: (1, E_pad)
    # o_ref:  (TR, E_pad)       lane-dense padded output tile
    # acc_ref:(TR, HID_pad)     f32 accumulator for x @ w1 across K
    k = pl.program_id(1)

    @pl.when(k == 0)
    def _():
        acc_ref[...] = jnp.zeros_like(acc_ref)

    acc_ref[...] += jnp.dot(
        x_ref[...], w1_ref[...], preferred_element_type=jnp.float32
    )

    @pl.when(k == pl.num_programs(1) - 1)
    def _():
        h = jnp.maximum(acc_ref[...] + b1_ref[...], 0.0)  # ReLU
        o = jnp.dot(h, w2_ref[...], preferred_element_type=jnp.float32)
        o_ref[...] = (o + b2_ref[...]).astype(o_ref.dtype)


def siamese_forward(x, w1, b1, w2, b2, *, row_tile=512, k_tile=2048):
    """x: (N, 2, C, H, W) float32 -> (N, 2, E) float32."""
    N, two, C, H, W = x.shape
    assert two == 2, "SiameseNet expects Nx2xCxHxW input"
    D_in = C * H * W
    HID = w1.shape[1]
    E = w2.shape[1]
    R = N * 2

    # Tile / padding sizes (f32: sublane multiple 8, lane multiple 128).
    TR = min(row_tile, _round_up(R, 8))
    R_pad = _round_up(R, TR)
    TK = min(k_tile, _round_up(D_in, 128))
    D_pad = _round_up(D_in, TK)
    HID_pad = _round_up(HID, 128)
    E_pad = _round_up(E, 128)

    # Fold the two siamese branches into the row axis: row = n * 2 + idx
    # ((C,H,W) flattened row-major, same as torch.flatten).
    x_rows = x.reshape(R, D_in).astype(jnp.float32)
    x_rows = jnp.pad(x_rows, ((0, R_pad - R), (0, D_pad - D_in)))

    # Zero-pad weights/biases to lane-dense widths; zeros keep results exact.
    w1_p = jnp.pad(w1.astype(jnp.float32), ((0, D_pad - D_in), (0, HID_pad - HID)))
    b1_p = jnp.pad(b1.reshape(1, HID).astype(jnp.float32), ((0, 0), (0, HID_pad - HID)))
    w2_p = jnp.pad(w2.astype(jnp.float32), ((0, HID_pad - HID), (0, E_pad - E)))
    b2_p = jnp.pad(b2.reshape(1, E).astype(jnp.float32), ((0, 0), (0, E_pad - E)))

    grid = (R_pad // TR, D_pad // TK)

    flops = 2 * R_pad * D_pad * HID_pad + 2 * R_pad * HID_pad * E_pad
    bytes_accessed = 4 * (
        x_rows.size + w1_p.size + b1_p.size + w2_p.size + b2_p.size + R_pad * E_pad
    )

    out_rows = pl.pallas_call(
        _siamese_mlp_kernel,
        out_shape=jax.ShapeDtypeStruct((R_pad, E_pad), jnp.float32),
        grid_spec=pltpu.PrefetchScalarGridSpec(
            num_scalar_prefetch=0,
            grid=grid,
            in_specs=[
                pl.BlockSpec((TR, TK), lambda i, k: (i, k)),        # x (streamed)
                pl.BlockSpec((TK, HID_pad), lambda i, k: (k, 0)),   # w1 (K-sliced)
                pl.BlockSpec((1, HID_pad), lambda i, k: (0, 0)),    # b1 (resident)
                pl.BlockSpec((HID_pad, E_pad), lambda i, k: (0, 0)),  # w2 (resident)
                pl.BlockSpec((1, E_pad), lambda i, k: (0, 0)),      # b2 (resident)
            ],
            out_specs=pl.BlockSpec((TR, E_pad), lambda i, k: (i, 0)),
            scratch_shapes=[pltpu.VMEM((TR, HID_pad), jnp.float32)],
        ),
        compiler_params=pltpu.CompilerParams(
            dimension_semantics=("parallel", "arbitrary"),
            vmem_limit_bytes=32 * 1024 * 1024,
        ),
        cost_estimate=pl.CostEstimate(
            flops=flops, transcendentals=0, bytes_accessed=bytes_accessed
        ),
    )(x_rows, w1_p, b1_p, w2_p, b2_p)

    # Drop row/lane padding; torch.stack(features, 1): out[n, idx] = emb(x[n, idx]).
    return out_rows[:R, :E].reshape(N, 2, E)


def init_params(key, d_in, hidden, embed):
    """Deterministic synthetic weights (uniform fan-in scaling, like nn.Linear)."""
    k1, k2, k3, k4 = jax.random.split(key, 4)
    lim1 = 1.0 / (d_in ** 0.5)
    lim2 = 1.0 / (hidden ** 0.5)
    w1 = jax.random.uniform(k1, (d_in, hidden), jnp.float32, -lim1, lim1)
    b1 = jax.random.uniform(k2, (1, hidden), jnp.float32, -lim1, lim1)
    w2 = jax.random.uniform(k3, (hidden, embed), jnp.float32, -lim2, lim2)
    b2 = jax.random.uniform(k4, (1, embed), jnp.float32, -lim2, lim2)
    return w1, b1, w2, b2


if __name__ == "__main__":
    # Small shapes consistent with Nx2xCxHxW.
    N, C, H, W = 2, 4, 16, 16
    HIDDEN, EMBED = 32, 32
    D_IN = C * H * W

    key = jax.random.PRNGKey(0)
    kx, kp = jax.random.split(key)
    x = jax.random.normal(kx, (N, 2, C, H, W), jnp.float32)
    w1, b1, w2, b2 = init_params(kp, D_IN, HIDDEN, EMBED)

    out = siamese_forward(x, w1, b1, w2, b2)
    out = jax.block_until_ready(out)

    # Pure-JAX reference check of the same semantics.
    def ref(x):
        feats = []
        for idx in range(2):
            xi = x[:, idx].reshape(N, D_IN)
            h = jnp.maximum(xi @ w1 + b1, 0.0)
            feats.append(h @ w2 + b2)
        return jnp.stack(feats, axis=1)

    expected = ref(x)
    assert out.shape == (N, 2, EMBED)
    assert jnp.allclose(out, expected, atol=1e-4, rtol=1e-4)

    print("KERNEL_OK")
</pallas_src>

<mosaic_0001>
module attributes {stable_mosaic.version = 11 : i64} {
  func.func @_siamese_mlp_kernel(%arg0: i32, %arg1: i32, %arg2: memref<8x1024xf32, #tpu.memory_space<vmem>>, %arg3: memref<1024x128xf32, #tpu.memory_space<vmem>>, %arg4: memref<1x128xf32, #tpu.memory_space<vmem>>, %arg5: memref<128x128xf32, #tpu.memory_space<vmem>>, %arg6: memref<1x128xf32, #tpu.memory_space<vmem>>, %arg7: memref<8x128xf32, #tpu.memory_space<vmem>>, %arg8: memref<8x128xf32, #tpu.memory_space<vmem>>) attributes {dimension_semantics = [#tpu.dimension_semantics<parallel>, #tpu.dimension_semantics<arbitrary>], iteration_bounds = array<i64: 1, 1>, scalar_prefetch = 0 : i64, scratch_operands = 1 : i64, tpu.core_type = #tpu.core_type<tc>, window_params = [{transform_indices = @transform_0, window_bounds = array<i64: 8, 1024>}, {transform_indices = @transform_1, window_bounds = array<i64: 1024, 128>}, {pipeline_mode = #tpu.pipeline_mode<synchronous>, transform_indices = @transform_2, window_bounds = array<i64: 1, 128>}, {pipeline_mode = #tpu.pipeline_mode<synchronous>, transform_indices = @transform_3, window_bounds = array<i64: 128, 128>}, {pipeline_mode = #tpu.pipeline_mode<synchronous>, transform_indices = @transform_4, window_bounds = array<i64: 1, 128>}, {transform_indices = @transform_5, window_bounds = array<i64: 8, 128>}]} {
    %c0_i32 = arith.constant 0 : i32
    %0 = arith.cmpi eq, %arg1, %c0_i32 : i32
    %1 = arith.extui %0 : i1 to i32
    %c0_i32_0 = arith.constant 0 : i32
    %2 = arith.cmpi ne, %1, %c0_i32_0 : i32
    scf.if %2 {
      %cst_10 = arith.constant 0.000000e+00 : f32
      %12 = vector.broadcast %cst_10 : f32 to vector<8x128xf32>
      %c0_11 = arith.constant 0 : index
      %c0_12 = arith.constant 0 : index
      %13 = vector.load %arg8[%c0_11, %c0_12] : memref<8x128xf32, #tpu.memory_space<vmem>>, vector<8x128xf32>
      tpu.vector_store %arg8[%c0_11, %c0_12], %12 {strides = array<i32>} : memref<8x128xf32, #tpu.memory_space<vmem>>, vector<8x128xf32>,
    } else {
    }
    %c0 = arith.constant 0 : index
    %c0_1 = arith.constant 0 : index
    %3 = vector.load %arg8[%c0, %c0_1] : memref<8x128xf32, #tpu.memory_space<vmem>>, vector<8x128xf32>
    %c0_2 = arith.constant 0 : index
    %c0_3 = arith.constant 0 : index
    %4 = vector.load %arg2[%c0_2, %c0_3] : memref<8x1024xf32, #tpu.memory_space<vmem>>, vector<8x1024xf32>
    %c0_4 = arith.constant 0 : index
    %c0_5 = arith.constant 0 : index
    %5 = vector.load %arg3[%c0_4, %c0_5] : memref<1024x128xf32, #tpu.memory_space<vmem>>, vector<1024x128xf32>
    %cst = arith.constant dense<0.000000e+00> : vector<8x128xf32>
    %6 = tpu.matmul %4, %5, %cst {dimension_numbers = #tpu.dot_dimension_numbers<[1], [0], [0], [1], [0, 0, 1, 1], [], []>} : vector<8x1024xf32>, vector<1024x128xf32>, vector<8x128xf32> -> vector<8x128xf32>
    %7 = arith.addf %3, %6 : vector<8x128xf32>
    %c0_6 = arith.constant 0 : index
    %c0_7 = arith.constant 0 : index
    %8 = vector.load %arg8[%c0_6, %c0_7] : memref<8x128xf32, #tpu.memory_space<vmem>>, vector<8x128xf32>
    tpu.vector_store %arg8[%c0_6, %c0_7], %7 {strides = array<i32>} : memref<8x128xf32, #tpu.memory_space<vmem>>, vector<8x128xf32>,
    %c0_i32_8 = arith.constant 0 : i32
    %9 = arith.cmpi eq, %arg1, %c0_i32_8 : i32
    %10 = arith.extui %9 : i1 to i32
    %c0_i32_9 = arith.constant 0 : i32
    %11 = arith.cmpi ne, %10, %c0_i32_9 : i32
    scf.if %11 {
      %c0_10 = arith.constant 0 : index
      %c0_11 = arith.constant 0 : index
      %12 = vector.load %arg8[%c0_10, %c0_11] : memref<8x128xf32, #tpu.memory_space<vmem>>, vector<8x128xf32>
      %c0_12 = arith.constant 0 : index
      %c0_13 = arith.constant 0 : index
      %13 = vector.load %arg4[%c0_12, %c0_13] : memref<1x128xf32, #tpu.memory_space<vmem>>, vector<1x128xf32>
      %14 = vector.broadcast %13 : vector<1x128xf32> to vector<8x128xf32>
      %15 = arith.addf %12, %14 : vector<8x128xf32>
      %cst_14 = arith.constant 0.000000e+00 : f32
      %16 = vector.broadcast %cst_14 : f32 to vector<8x128xf32>
      %17 = arith.maximumf %15, %16 : vector<8x128xf32>
      %c0_15 = arith.constant 0 : index
      %c0_16 = arith.constant 0 : index
      %18 = vector.load %arg5[%c0_15, %c0_16] : memref<128x128xf32, #tpu.memory_space<vmem>>, vector<128x128xf32>
      %cst_17 = arith.constant dense<0.000000e+00> : vector<8x128xf32>
      %19 = tpu.matmul %17, %18, %cst_17 {dimension_numbers = #tpu.dot_dimension_numbers<[1], [0], [0], [1], [0, 0, 1, 1], [], []>} : vector<8x128xf32>, vector<128x128xf32>, vector<8x128xf32> -> vector<8x128xf32>
      %c0_18 = arith.constant 0 : index
      %c0_19 = arith.constant 0 : index
      %20 = vector.load %arg6[%c0_18, %c0_19] : memref<1x128xf32, #tpu.memory_space<vmem>>, vector<1x128xf32>
      %21 = vector.broadcast %20 : vector<1x128xf32> to vector<8x128xf32>
      %22 = arith.addf %19, %21 : vector<8x128xf32>
      %c0_20 = arith.constant 0 : index
      %c0_21 = arith.constant 0 : index
      %23 = vector.load %arg7[%c0_20, %c0_21] : memref<8x128xf32, #tpu.memory_space<vmem>>, vector<8x128xf32>
      tpu.vector_store %arg7[%c0_20, %c0_21], %22 {strides = array<i32>} : memref<8x128xf32, #tpu.memory_space<vmem>>, vector<8x128xf32>,
    } else {
    }
    return
  }
  func.func @transform_0(%arg0: i32, %arg1: i32) -> (i32, i32) {
    %c0_i32 = arith.constant 0 : i32
    return %arg0, %arg1 : i32, i32
  }
  func.func @transform_1(%arg0: i32, %arg1: i32) -> (i32, i32) {
    %c0_i32 = arith.constant 0 : i32
    %c0_i32_0 = arith.constant 0 : i32
    return %arg1, %c0_i32 : i32, i32
  }
  func.func @transform_2(%arg0: i32, %arg1: i32) -> (i32, i32) {
    %c0_i32 = arith.constant 0 : i32
    %c0_i32_0 = arith.constant 0 : i32
    %c0_i32_1 = arith.constant 0 : i32
    return %c0_i32, %c0_i32_0 : i32, i32
  }
  func.func @transform_3(%arg0: i32, %arg1: i32) -> (i32, i32) {
    %c0_i32 = arith.constant 0 : i32
    %c0_i32_0 = arith.constant 0 : i32
    %c0_i32_1 = arith.constant 0 : i32
    return %c0_i32, %c0_i32_0 : i32, i32
  }
  func.func @transform_4(%arg0: i32, %arg1: i32) -> (i32, i32) {
    %c0_i32 = arith.constant 0 : i32
    %c0_i32_0 = arith.constant 0 : i32
    %c0_i32_1 = arith.constant 0 : i32
    return %c0_i32, %c0_i32_0 : i32, i32
  }
  func.func @transform_5(%arg0: i32, %arg1: i32) -> (i32, i32) {
    %c0_i32 = arith.constant 0 : i32
    %c0_i32_0 = arith.constant 0 : i32
    return %arg0, %c0_i32 : i32, i32
  }
}

</mosaic_0001>

<llo_original>
// kernel: tpu_custom_call.1
$region0: #{tpu_custom_call.1}
  #allocation0 [shape = 'u32[]', space=smem, size = 0x4, offset = 0x4, fixed_abs, tag = 'smem constant byte address 0x4 - core index']
  #allocation1 [shape = 'u32[72,128]{1,0:T(1,128)}', space=vmem, size = 0x9000, scoped, tag = 'internal scratch']
  #allocation2 [shape = 'f32[8,128]{1,0:T(8,128)}', space=vmem, size = 0x1000, scoped, tag = 'scratch operand']
  %s0 = inlined_call_operand.hbm [shape: f32[8,1024], index: 0, kind: input, shape index: {}]
  %s1 = inlined_call_operand.hbm [shape: f32[1024,128], index: 1, kind: input, shape index: {}]
  %s2 = inlined_call_operand.vmem [shape: f32[1,128], index: 2, kind: input, shape index: {}]
  %s3 = inlined_call_operand.hbm [shape: f32[128,128], index: 3, kind: input, shape index: {}]
  %s4 = inlined_call_operand.vmem [shape: f32[1,128], index: 4, kind: input, shape index: {}]
  %s5 = inlined_call_operand.hbm [shape: f32[8,128], index: 5, kind: output, shape index: {}]
  %s6 = sld [smem:[#allocation0]]
  $region50: #{tpu_custom_call.1} parent=0
    _
  %s8 = ssub.s32 1, %s6
  %s9 = scalar_select 0, %s8, %s6
  $region1: #{tpu_custom_call.1} parent=0
    #allocation3 [shape = 'u8[32768]{0}', space=vmem, size = 0x8000, scoped, tag = 'input window, operand 0, single buffered']
    #allocation4 [shape = 's32[1]{0}', space=sflag, size = 0x4, scoped, tag = 'scoped memory for tpu_custom_call.1']
    #allocation5 [shape = 's32[1]{0}', space=sflag, size = 0x4, scoped, tag = 'scoped memory for tpu_custom_call.1']
    #allocation6 [shape = 'u8[524288]{0}', space=vmem, size = 0x80000, scoped, tag = 'input window, operand 1, single buffered']
    #allocation7 [shape = 's32[1]{0}', space=sflag, size = 0x4, scoped, tag = 'scoped memory for tpu_custom_call.1']
    #allocation8 [shape = 'u8[65536]{0}', space=vmem, size = 0x10000, scoped, tag = 'input window, operand 3, single buffered']
    #allocation9 [shape = 'u8[4096]{0}', space=vmem, size = 0x1000, scoped, tag = 'output window, operand 0, single buffered']
    %10 = vsyncpa [#allocation4], 0
    %11 = vsyncpa [#allocation7], 0
    %12 = vsyncpa [#allocation5], 0
    // Predicated region
    $region2: #{tpu_custom_call.1} parent=1 // pred_check
      _
    $region3: #{tpu_custom_call.1} parent=1 // pred_check_branch
      %14 = sbr.rel (0) target = $region5
    $region4: #{tpu_custom_call.1} parent=1 // pred_region
      %16 = vsyncadd [#allocation4], 0
      %s18 = sshll.u32 %s0, 4
      %s19 = int_to_ptr.hbm [resolvable:$true] %s18
      %s20 = sshll.u32 [#allocation3], 4
      %s21 = int_to_ptr.vmem [resolvable:$true] %s20
      %23 = dma.hbm_to_vmem [thread:$0]  %s19, 1024, %s21, [#allocation4]
    $region5: #{tpu_custom_call.1} parent=1 // pred_fallthru
      _
    // Predicated region
    $region6: #{tpu_custom_call.1} parent=1 // pred_check
      _
    $region7: #{tpu_custom_call.1} parent=1 // pred_check_branch
      %25 = sbr.rel (0) target = $region9
    $region8: #{tpu_custom_call.1} parent=1 // pred_region
      %27 = vsyncadd [#allocation7], 0
      %s28 = sshll.u32 %s1, 4
      %s29 = int_to_ptr.hbm [resolvable:$true] %s28
      %s30 = sshll.u32 [#allocation6], 4
      %s31 = int_to_ptr.vmem [resolvable:$true] %s30
      %36 = dma.hbm_to_vmem [thread:$0]  %s29, 16384, %s31, [#allocation7], 128, 128, 8
    $region9: #{tpu_custom_call.1} parent=1 // pred_fallthru
      _
    // Predicated region
    $region10: #{tpu_custom_call.1} parent=1 // pred_check
      _
    $region11: #{tpu_custom_call.1} parent=1 // pred_check_branch
      %38 = sbr.rel (0) target = $region13
    $region12: #{tpu_custom_call.1} parent=1 // pred_region
      _
    $region13: #{tpu_custom_call.1} parent=1 // pred_fallthru
      _
    // Predicated region
    $region14: #{tpu_custom_call.1} parent=1 // pred_check
      _
    $region15: #{tpu_custom_call.1} parent=1 // pred_check_branch
      %40 = sbr.rel (0) target = $region17
    $region16: #{tpu_custom_call.1} parent=1 // pred_region
      %42 = vsyncadd [#allocation7], 0
      %s43 = sshll.u32 %s3, 4
      %s44 = int_to_ptr.hbm [resolvable:$true] %s43
      %s45 = sshll.u32 [#allocation8], 4
      %s46 = int_to_ptr.vmem [resolvable:$true] %s45
      %51 = dma.hbm_to_vmem [thread:$0]  %s44, 2048, %s46, [#allocation7], 128, 128, 8
    $region17: #{tpu_custom_call.1} parent=1 // pred_fallthru
      _
    // Predicated region
    $region18: #{tpu_custom_call.1} parent=1 // pred_check
      _
    $region19: #{tpu_custom_call.1} parent=1 // pred_check_branch
      %53 = sbr.rel (0) target = $region21
    $region20: #{tpu_custom_call.1} parent=1 // pred_region
      _
    $region21: #{tpu_custom_call.1} parent=1 // pred_fallthru
      _
    // Predicated region
    $region22: #{tpu_custom_call.1} parent=1 // pred_check
      _
    $region23: #{tpu_custom_call.1} parent=1 // pred_check_branch
      %55 = sbr.rel (0) target = $region25
    $region24: #{tpu_custom_call.1} parent=1 // pred_region
      %57 = dma.done [#allocation4], 1024
    $region25: #{tpu_custom_call.1} parent=1 // pred_fallthru
      _
    // Predicated region
    $region26: #{tpu_custom_call.1} parent=1 // pred_check
      _
    $region27: #{tpu_custom_call.1} parent=1 // pred_check_branch
      %59 = sbr.rel (0) target = $region29
    $region28: #{tpu_custom_call.1} parent=1 // pred_region
      %61 = dma.done [#allocation7], 16384
    $region29: #{tpu_custom_call.1} parent=1 // pred_fallthru
      _
    // Predicated region
    $region30: #{tpu_custom_call.1} parent=1 // pred_check
      _
    $region31: #{tpu_custom_call.1} parent=1 // pred_check_branch
      %63 = sbr.rel (0) target = $region33
    $region32: #{tpu_custom_call.1} parent=1 // pred_region
      %65 = dma.done [#allocation7], 2048
    $region33: #{tpu_custom_call.1} parent=1 // pred_fallthru
      _
    %p66 = scmp.eq.s32.totalorder 0, 0
    // Predicated region
    $region34: #{tpu_custom_call.1} parent=1 // pred_check
      %p67 = pneg %p66
    $region35: #{tpu_custom_call.1} parent=1 // pred_check_branch
      %69 = sbr.rel (%p67) target = $region37
    $region36: #{tpu_custom_call.1} parent=1 // pred_region
      %70 = vst [vmem:[#allocation2] sm:$0xff] 0.0
    $region37: #{tpu_custom_call.1} parent=1 // pred_fallthru
      _
    %v71 = vld [vmem:[#allocation2] sm:$0xff]
    %v72 = vld [vmem:[#allocation3] sm:$0xff]
    %v73 = vld [vmem:[#allocation3 + $0x8] sm:$0xff]
    %v74 = vld [vmem:[#allocation3 + $0x10] sm:$0xff]
    %v75 = vld [vmem:[#allocation3 + $0x18] sm:$0xff]
    %v76 = vld [vmem:[#allocation3 + $0x20] sm:$0xff]
    %v77 = vld [vmem:[#allocation3 + $0x28] sm:$0xff]
    %v78 = vld [vmem:[#allocation3 + $0x30] sm:$0xff]
    %v79 = vld [vmem:[#allocation3 + $0x38] sm:$0xff]
    %v80 = vld [vmem:[#allocation6] sm:$0xff]
    %v81 = vld [vmem:[#allocation6 + $0x8] sm:$0xff]
    %v82 = vld [vmem:[#allocation6 + $0x10] sm:$0xff]
    %v83 = vld [vmem:[#allocation6 + $0x18] sm:$0xff]
    %v84 = vld [vmem:[#allocation6 + $0x20] sm:$0xff]
    %v85 = vld [vmem:[#allocation6 + $0x28] sm:$0xff]
    %v86 = vld [vmem:[#allocation6 + $0x30] sm:$0xff]
    %v87 = vld [vmem:[#allocation6 + $0x38] sm:$0xff]
    %v88 = vld [vmem:[#allocation6 + $0x40] sm:$0xff]
    %v89 = vld [vmem:[#allocation6 + $0x48] sm:$0xff]
    %v90 = vld [vmem:[#allocation6 + $0x50] sm:$0xff]
    %v91 = vld [vmem:[#allocation6 + $0x58] sm:$0xff]
    %v92 = vld [vmem:[#allocation6 + $0x60] sm:$0xff]
    %v93 = vld [vmem:[#allocation6 + $0x68] sm:$0xff]
    %v94 = vld [vmem:[#allocation6 + $0x70] sm:$0xff]
    %v95 = vld [vmem:[#allocation6 + $0x78] sm:$0xff]
    %v96 = vld [vmem:[#allocation6 + $0x80] sm:$0xff]
    %v97 = vld [vmem:[#allocation6 + $0x88] sm:$0xff]
    %v98 = vld [vmem:[#allocation6 + $0x90] sm:$0xff]
    %v99 = vld [vmem:[#allocation6 + $0x98] sm:$0xff]
    %v100 = vld [vmem:[#allocation6 + $0xa0] sm:$0xff]
    %v101 = vld [vmem:[#allocation6 + $0xa8] sm:$0xff]
    %v102 = vld [vmem:[#allocation6 + $0xb0] sm:$0xff]
    %v103 = vld [vmem:[#allocation6 + $0xb8] sm:$0xff]
    %v104 = vld [vmem:[#allocation6 + $0xc0] sm:$0xff]
    %v105 = vld [vmem:[#allocation6 + $0xc8] sm:$0xff]
    %v106 = vld [vmem:[#allocation6 + $0xd0] sm:$0xff]
    %v107 = vld [vmem:[#allocation6 + $0xd8] sm:$0xff]
    %v108 = vld [vmem:[#allocation6 + $0xe0] sm:$0xff]
    %v109 = vld [vmem:[#allocation6 + $0xe8] sm:$0xff]
    %v110 = vld [vmem:[#allocation6 + $0xf0] sm:$0xff]
    %v111 = vld [vmem:[#allocation6 + $0xf8] sm:$0xff]
    %v112 = vld [vmem:[#allocation6 + $0x100] sm:$0xff]
    %v113 = vld [vmem:[#allocation6 + $0x108] sm:$0xff]
    %v114 = vld [vmem:[#allocation6 + $0x110] sm:$0xff]
    %v115 = vld [vmem:[#allocation6 + $0x118] sm:$0xff]
    %v116 = vld [vmem:[#allocation6 + $0x120] sm:$0xff]
    %v117 = vld [vmem:[#allocation6 + $0x128] sm:$0xff]
    %v118 = vld [vmem:[#allocation6 + $0x130] sm:$0xff]
    %v119 = vld [vmem:[#allocation6 + $0x138] sm:$0xff]
    %v120 = vld [vmem:[#allocation6 + $0x140] sm:$0xff]
    %v121 = vld [vmem:[#allocation6 + $0x148] sm:$0xff]
    %v122 = vld [vmem:[#allocation6 + $0x150] sm:$0xff]
    %v123 = vld [vmem:[#allocation6 + $0x158] sm:$0xff]
    %v124 = vld [vmem:[#allocation6 + $0x160] sm:$0xff]
    %v125 = vld [vmem:[#allocation6 + $0x168] sm:$0xff]
    %v126 = vld [vmem:[#allocation6 + $0x170] sm:$0xff]
    %v127 = vld [vmem:[#allocation6 + $0x178] sm:$0xff]
    %v128 = vld [vmem:[#allocation6 + $0x180] sm:$0xff]
    %v129 = vld [vmem:[#allocation6 + $0x188] sm:$0xff]
    %v130 = vld [vmem:[#allocation6 + $0x190] sm:$0xff]
    %v131 = vld [vmem:[#allocation6 + $0x198] sm:$0xff]
    %v132 = vld [vmem:[#allocation6 + $0x1a0] sm:$0xff]
    %v133 = vld [vmem:[#allocation6 + $0x1a8] sm:$0xff]
    %v134 = vld [vmem:[#allocation6 + $0x1b0] sm:$0xff]
    %v135 = vld [vmem:[#allocation6 + $0x1b8] sm:$0xff]
    %v136 = vld [vmem:[#allocation6 + $0x1c0] sm:$0xff]
    %v137 = vld [vmem:[#allocation6 + $0x1c8] sm:$0xff]
    %v138 = vld [vmem:[#allocation6 + $0x1d0] sm:$0xff]
    %v139 = vld [vmem:[#allocation6 + $0x1d8] sm:$0xff]
    %v140 = vld [vmem:[#allocation6 + $0x1e0] sm:$0xff]
    %v141 = vld [vmem:[#allocation6 + $0x1e8] sm:$0xff]
    %v142 = vld [vmem:[#allocation6 + $0x1f0] sm:$0xff]
    %v143 = vld [vmem:[#allocation6 + $0x1f8] sm:$0xff]
    %v144 = vld [vmem:[#allocation6 + $0x200] sm:$0xff]
    %v145 = vld [vmem:[#allocation6 + $0x208] sm:$0xff]
    %v146 = vld [vmem:[#allocation6 + $0x210] sm:$0xff]
    %v147 = vld [vmem:[#allocation6 + $0x218] sm:$0xff]
    %v148 = vld [vmem:[#allocation6 + $0x220] sm:$0xff]
    %v149 = vld [vmem:[#allocation6 + $0x228] sm:$0xff]
    %v150 = vld [vmem:[#allocation6 + $0x230] sm:$0xff]
    %v151 = vld [vmem:[#allocation6 + $0x238] sm:$0xff]
    %v152 = vld [vmem:[#allocation6 + $0x240] sm:$0xff]
    %v153 = vld [vmem:[#allocation6 + $0x248] sm:$0xff]
    %v154 = vld [vmem:[#allocation6 + $0x250] sm:$0xff]
    %v155 = vld [vmem:[#allocation6 + $0x258] sm:$0xff]
    %v156 = vld [vmem:[#allocation6 + $0x260] sm:$0xff]
    %v157 = vld [vmem:[#allocation6 + $0x268] sm:$0xff]
    %v158 = vld [vmem:[#allocation6 + $0x270] sm:$0xff]
    %v159 = vld [vmem:[#allocation6 + $0x278] sm:$0xff]
    %v160 = vld [vmem:[#allocation6 + $0x280] sm:$0xff]
    %v161 = vld [vmem:[#allocation6 + $0x288] sm:$0xff]
    %v162 = vld [vmem:[#allocation6 + $0x290] sm:$0xff]
    %v163 = vld [vmem:[#allocation6 + $0x298] sm:$0xff]
    %v164 = vld [vmem:[#allocation6 + $0x2a0] sm:$0xff]
    %v165 = vld [vmem:[#allocation6 + $0x2a8] sm:$0xff]
    %v166 = vld [vmem:[#allocation6 + $0x2b0] sm:$0xff]
    %v167 = vld [vmem:[#allocation6 + $0x2b8] sm:$0xff]
    %v168 = vld [vmem:[#allocation6 + $0x2c0] sm:$0xff]
    %v169 = vld [vmem:[#allocation6 + $0x2c8] sm:$0xff]
    %v170 = vld [vmem:[#allocation6 + $0x2d0] sm:$0xff]
    %v171 = vld [vmem:[#allocation6 + $0x2d8] sm:$0xff]
    %v172 = vld [vmem:[#allocation6 + $0x2e0] sm:$0xff]
    %v173 = vld [vmem:[#allocation6 + $0x2e8] sm:$0xff]
    %v174 = vld [vmem:[#allocation6 + $0x2f0] sm:$0xff]
    %v175 = vld [vmem:[#allocation6 + $0x2f8] sm:$0xff]
    %v176 = vld [vmem:[#allocation6 + $0x300] sm:$0xff]
    %v177 = vld [vmem:[#allocation6 + $0x308] sm:$0xff]
    %v178 = vld [vmem:[#allocation6 + $0x310] sm:$0xff]
    %v179 = vld [vmem:[#allocation6 + $0x318] sm:$0xff]
    %v180 = vld [vmem:[#allocation6 + $0x320] sm:$0xff]
    %v181 = vld [vmem:[#allocation6 + $0x328] sm:$0xff]
    %v182 = vld [vmem:[#allocation6 + $0x330] sm:$0xff]
    %v183 = vld [vmem:[#allocation6 + $0x338] sm:$0xff]
    %v184 = vld [vmem:[#allocation6 + $0x340] sm:$0xff]
    %v185 = vld [vmem:[#allocation6 + $0x348] sm:$0xff]
    %v186 = vld [vmem:[#allocation6 + $0x350] sm:$0xff]
    %v187 = vld [vmem:[#allocation6 + $0x358] sm:$0xff]
    %v188 = vld [vmem:[#allocation6 + $0x360] sm:$0xff]
    %v189 = vld [vmem:[#allocation6 + $0x368] sm:$0xff]
    %v190 = vld [vmem:[#allocation6 + $0x370] sm:$0xff]
    %v191 = vld [vmem:[#allocation6 + $0x378] sm:$0xff]
    %v192 = vld [vmem:[#allocation6 + $0x380] sm:$0xff]
    %v193 = vld [vmem:[#allocation6 + $0x388] sm:$0xff]
    %v194 = vld [vmem:[#allocation6 + $0x390] sm:$0xff]
    %v195 = vld [vmem:[#allocation6 + $0x398] sm:$0xff]
    %v196 = vld [vmem:[#allocation6 + $0x3a0] sm:$0xff]
    %v197 = vld [vmem:[#allocation6 + $0x3a8] sm:$0xff]
    %v198 = vld [vmem:[#allocation6 + $0x3b0] sm:$0xff]
    %v199 = vld [vmem:[#allocation6 + $0x3b8] sm:$0xff]
    %v200 = vld [vmem:[#allocation6 + $0x3c0] sm:$0xff]
    %v201 = vld [vmem:[#allocation6 + $0x3c8] sm:$0xff]
    %v202 = vld [vmem:[#allocation6 + $0x3d0] sm:$0xff]
    %v203 = vld [vmem:[#allocation6 + $0x3d8] sm:$0xff]
    %v204 = vld [vmem:[#allocation6 + $0x3e0] sm:$0xff]
    %v205 = vld [vmem:[#allocation6 + $0x3e8] sm:$0xff]
    %v206 = vld [vmem:[#allocation6 + $0x3f0] sm:$0xff]
    %v207 = vld [vmem:[#allocation6 + $0x3f8] sm:$0xff]
    %208 = vmatpush.msra.mxu0 %v95
    %209 = vmatpush.msra.mxu0 %v94
    %210 = vmatpush.msra.mxu0 %v93
    %211 = vmatpush.msra.mxu0 %v92
    %212 = vmatpush.msra.mxu0 %v91
    %213 = vmatpush.msra.mxu0 %v90
    %214 = vmatpush.msra.mxu0 %v89
    %215 = vmatpush.msra.mxu0 %v88
    %216 = vmatpush.msra.mxu0 %v87
    %217 = vmatpush.msra.mxu0 %v86
    %218 = vmatpush.msra.mxu0 %v85
    %219 = vmatpush.msra.mxu0 %v84
    %220 = vmatpush.msra.mxu0 %v83
    %221 = vmatpush.msra.mxu0 %v82
    %222 = vmatpush.msra.mxu0 %v81
    %223 = vmatpush.msra.mxu0 %v80
    %224 = vmatmul.f32.gmra.mxu0 %v72
    %v225 = vpop.f32.mrf.mxu0
    %v226 = vadd.f32 0.0, %v225
    %227 = vdwg.mxu0
    %228 = vmatpush.msra.mxu0 %v111
    %229 = vmatpush.msra.mxu0 %v110
    %230 = vmatpush.msra.mxu0 %v109
    %231 = vmatpush.msra.mxu0 %v108
    %232 = vmatpush.msra.mxu0 %v107
    %233 = vmatpush.msra.mxu0 %v106
    %234 = vmatpush.msra.mxu0 %v105
    %235 = vmatpush.msra.mxu0 %v104
    %236 = vmatpush.msra.mxu0 %v103
    %237 = vmatpush.msra.mxu0 %v102
    %238 = vmatpush.msra.mxu0 %v101
    %239 = vmatpush.msra.mxu0 %v100
    %240 = vmatpush.msra.mxu0 %v99
    %241 = vmatpush.msra.mxu0 %v98
    %242 = vmatpush.msra.mxu0 %v97
    %243 = vmatpush.msra.mxu0 %v96
    %244 = vmatmul.f32.gmra.mxu0 %v73
    %v245 = vpop.f32.mrf.mxu0
    %v246 = vadd.f32 %v226, %v245
    %247 = vdwg.mxu0
    %248 = vmatpush.msra.mxu0 %v127
    %249 = vmatpush.msra.mxu0 %v126
    %250 = vmatpush.msra.mxu0 %v125
    %251 = vmatpush.msra.mxu0 %v124
    %252 = vmatpush.msra.mxu0 %v123
    %253 = vmatpush.msra.mxu0 %v122
    %254 = vmatpush.msra.mxu0 %v121
    %255 = vmatpush.msra.mxu0 %v120
    %256 = vmatpush.msra.mxu0 %v119
    %257 = vmatpush.msra.mxu0 %v118
    %258 = vmatpush.msra.mxu0 %v117
    %259 = vmatpush.msra.mxu0 %v116
    %260 = vmatpush.msra.mxu0 %v115
    %261 = vmatpush.msra.mxu0 %v114
    %262 = vmatpush.msra.mxu0 %v113
    %263 = vmatpush.msra.mxu0 %v112
    %264 = vmatmul.f32.gmra.mxu0 %v74
    %v265 = vpop.f32.mrf.mxu0
    %v266 = vadd.f32 %v246, %v265
    %267 = vdwg.mxu0
    %268 = vmatpush.msra.mxu0 %v143
    %269 = vmatpush.msra.mxu0 %v142
    %270 = vmatpush.msra.mxu0 %v141
    %271 = vmatpush.msra.mxu0 %v140
    %272 = vmatpush.msra.mxu0 %v139
    %273 = vmatpush.msra.mxu0 %v138
    %274 = vmatpush.msra.mxu0 %v137
    %275 = vmatpush.msra.mxu0 %v136
    %276 = vmatpush.msra.mxu0 %v135
    %277 = vmatpush.msra.mxu0 %v134
    %278 = vmatpush.msra.mxu0 %v133
    %279 = vmatpush.msra.mxu0 %v132
    %280 = vmatpush.msra.mxu0 %v131
    %281 = vmatpush.msra.mxu0 %v130
    %282 = vmatpush.msra.mxu0 %v129
    %283 = vmatpush.msra.mxu0 %v128
    %284 = vmatmul.f32.gmra.mxu0 %v75
    %v285 = vpop.f32.mrf.mxu0
    %v286 = vadd.f32 %v266, %v285
    %287 = vdwg.mxu0
    %288 = vmatpush.msra.mxu0 %v159
    %289 = vmatpush.msra.mxu0 %v158
    %290 = vmatpush.msra.mxu0 %v157
    %291 = vmatpush.msra.mxu0 %v156
    %292 = vmatpush.msra.mxu0 %v155
    %293 = vmatpush.msra.mxu0 %v154
    %294 = vmatpush.msra.mxu0 %v153
    %295 = vmatpush.msra.mxu0 %v152
    %296 = vmatpush.msra.mxu0 %v151
    %297 = vmatpush.msra.mxu0 %v150
    %298 = vmatpush.msra.mxu0 %v149
    %299 = vmatpush.msra.mxu0 %v148
    %300 = vmatpush.msra.mxu0 %v147
    %301 = vmatpush.msra.mxu0 %v146
    %302 = vmatpush.msra.mxu0 %v145
    %303 = vmatpush.msra.mxu0 %v144
    %304 = vmatmul.f32.gmra.mxu0 %v76
    %v305 = vpop.f32.mrf.mxu0
    %v306 = vadd.f32 %v286, %v305
    %307 = vdwg.mxu0
    %308 = vmatpush.msra.mxu0 %v175
    %309 = vmatpush.msra.mxu0 %v174
    %310 = vmatpush.msra.mxu0 %v173
    %311 = vmatpush.msra.mxu0 %v172
    %312 = vmatpush.msra.mxu0 %v171
    %313 = vmatpush.msra.mxu0 %v170
    %314 = vmatpush.msra.mxu0 %v169
    %315 = vmatpush.msra.mxu0 %v168
    %316 = vmatpush.msra.mxu0 %v167
    %317 = vmatpush.msra.mxu0 %v166
    %318 = vmatpush.msra.mxu0 %v165
    %319 = vmatpush.msra.mxu0 %v164
    %320 = vmatpush.msra.mxu0 %v163
    %321 = vmatpush.msra.mxu0 %v162
    %322 = vmatpush.msra.mxu0 %v161
    %323 = vmatpush.msra.mxu0 %v160
    %324 = vmatmul.f32.gmra.mxu0 %v77
    %v325 = vpop.f32.mrf.mxu0
    %v326 = vadd.f32 %v306, %v325
    %327 = vdwg.mxu0
    %328 = vmatpush.msra.mxu0 %v191
    %329 = vmatpush.msra.mxu0 %v190
    %330 = vmatpush.msra.mxu0 %v189
    %331 = vmatpush.msra.mxu0 %v188
    %332 = vmatpush.msra.mxu0 %v187
    %333 = vmatpush.msra.mxu0 %v186
    %334 = vmatpush.msra.mxu0 %v185
    %335 = vmatpush.msra.mxu0 %v184
    %336 = vmatpush.msra.mxu0 %v183
    %337 = vmatpush.msra.mxu0 %v182
    %338 = vmatpush.msra.mxu0 %v181
    %339 = vmatpush.msra.mxu0 %v180
    %340 = vmatpush.msra.mxu0 %v179
    %341 = vmatpush.msra.mxu0 %v178
    %342 = vmatpush.msra.mxu0 %v177
    %343 = vmatpush.msra.mxu0 %v176
    %344 = vmatmul.f32.gmra.mxu0 %v78
    %v345 = vpop.f32.mrf.mxu0
    %v346 = vadd.f32 %v326, %v345
    %347 = vdwg.mxu0
    %348 = vmatpush.msra.mxu0 %v207
    %349 = vmatpush.msra.mxu0 %v206
    %350 = vmatpush.msra.mxu0 %v205
    %351 = vmatpush.msra.mxu0 %v204
    %352 = vmatpush.msra.mxu0 %v203
    %353 = vmatpush.msra.mxu0 %v202
    %354 = vmatpush.msra.mxu0 %v201
    %355 = vmatpush.msra.mxu0 %v200
    %356 = vmatpush.msra.mxu0 %v199
    %357 = vmatpush.msra.mxu0 %v198
    %358 = vmatpush.msra.mxu0 %v197
    %359 = vmatpush.msra.mxu0 %v196
    %360 = vmatpush.msra.mxu0 %v195
    %361 = vmatpush.msra.mxu0 %v194
    %362 = vmatpush.msra.mxu0 %v193
    %363 = vmatpush.msra.mxu0 %v192
    %364 = vmatmul.f32.gmra.mxu0 %v79
    %v365 = vpop.f32.mrf.mxu0
    %v366 = vadd.f32 %v346, %v365
    %367 = vdwg.mxu0
    %v368 = vadd.f32 %v71, %v366
    %369 = vst [vmem:[#allocation2] sm:$0xff] %v368
    // Predicated region
    $region38: #{tpu_custom_call.1} parent=1 // pred_check
      %p370 = pneg %p66
    $region39: #{tpu_custom_call.1} parent=1 // pred_check_branch
      %372 = sbr.rel (%p370) target = $region41
    $region40: #{tpu_custom_call.1} parent=1 // pred_region
      %v373 = vld [vmem:[#allocation2] sm:$0xff]
      %v374 = vld [vmem:[%s2] sm:$0x1]
      %v376 = vperm.slane %v374, 0
      %v378 = vadd.f32 %v373, %v376
      %v379 = vmax.f32 %v378, 0.0
      %v380 = vld [vmem:[#allocation8] sm:$0xff]
      %v381 = vld [vmem:[#allocation8 + $0x8] sm:$0xff]
      %v382 = vld [vmem:[#allocation8 + $0x10] sm:$0xff]
      %v383 = vld [vmem:[#allocation8 + $0x18] sm:$0xff]
      %v384 = vld [vmem:[#allocation8 + $0x20] sm:$0xff]
      %v385 = vld [vmem:[#allocation8 + $0x28] sm:$0xff]
      %v386 = vld [vmem:[#allocation8 + $0x30] sm:$0xff]
      %v387 = vld [vmem:[#allocation8 + $0x38] sm:$0xff]
      %v388 = vld [vmem:[#allocation8 + $0x40] sm:$0xff]
      %v389 = vld [vmem:[#allocation8 + $0x48] sm:$0xff]
      %v390 = vld [vmem:[#allocation8 + $0x50] sm:$0xff]
      %v391 = vld [vmem:[#allocation8 + $0x58] sm:$0xff]
      %v392 = vld [vmem:[#allocation8 + $0x60] sm:$0xff]
      %v393 = vld [vmem:[#allocation8 + $0x68] sm:$0xff]
      %v394 = vld [vmem:[#allocation8 + $0x70] sm:$0xff]
      %v395 = vld [vmem:[#allocation8 + $0x78] sm:$0xff]
      %v396 = vld [vmem:[%s4] sm:$0x1]
      %v398 = vperm.slane %v396, 0
      %400 = vmatpush.msra.mxu0 %v395
      %401 = vmatpush.msra.mxu0 %v394
      %402 = vmatpush.msra.mxu0 %v393
      %403 = vmatpush.msra.mxu0 %v392
      %404 = vmatpush.msra.mxu0 %v391
      %405 = vmatpush.msra.mxu0 %v390
      %406 = vmatpush.msra.mxu0 %v389
      %407 = vmatpush.msra.mxu0 %v388
      %408 = vmatpush.msra.mxu0 %v387
      %409 = vmatpush.msra.mxu0 %v386
      %410 = vmatpush.msra.mxu0 %v385
      %411 = vmatpush.msra.mxu0 %v384
      %412 = vmatpush.msra.mxu0 %v383
      %413 = vmatpush.msra.mxu0 %v382
      %414 = vmatpush.msra.mxu0 %v381
      %415 = vmatpush.msra.mxu0 %v380
      %416 = vmatmul.f32.gmra.mxu0 %v379
      %v417 = vpop.f32.mrf.mxu0
      %v418 = vadd.f32 %v398, %v417
      %419 = vdwg.mxu0
      %420 = vst [vmem:[#allocation9] sm:$0xff] %v418
    $region41: #{tpu_custom_call.1} parent=1 // pred_fallthru
      _
    // Predicated region
    $region42: #{tpu_custom_call.1} parent=1 // pred_check
      _
    $region43: #{tpu_custom_call.1} parent=1 // pred_check_branch
      %422 = sbr.rel (0) target = $region45
    $region44: #{tpu_custom_call.1} parent=1 // pred_region
      %424 = vsyncadd [#allocation5], 0
      %s426 = sshll.u32 [#allocation9], 4
      %s427 = int_to_ptr.vmem [resolvable:$true] %s426
      %s428 = sshll.u32 %s5, 4
      %s429 = int_to_ptr.hbm [resolvable:$true] %s428
      %431 = dma.vmem_to_hbm [thread:$0]  %s427, 128, %s429, [#allocation5]
    $region45: #{tpu_custom_call.1} parent=1 // pred_fallthru
      _
    // Predicated region
    $region46: #{tpu_custom_call.1} parent=1 // pred_check
      _
    $region47: #{tpu_custom_call.1} parent=1 // pred_check_branch
      %433 = sbr.rel (0) target = $region49
    $region48: #{tpu_custom_call.1} parent=1 // pred_region
      %435 = dma.done [#allocation5], 128
    $region49: #{tpu_custom_call.1} parent=1 // pred_fallthru
      _
    %436 = vsyncpa [#allocation4], 1
    %437 = vsyncpa [#allocation7], 1
    %438 = vsyncpa [#allocation5], 1

</llo_original>
